<compile_context>
chip_gen: v6e
topology: v6e:2x2x1
jax: 0.10.0
libtpu: 0.0.40
codegen_flags: <defaults>
</compile_context>

<pallas_src>
import jax
import jax.numpy as jnp
from jax import lax
from jax.experimental import pallas as pl
from jax.experimental.pallas import tpu as pltpu

_KS = 5        # conv kernel size
_C1 = 6        # conv1 output channels
_C2 = 16       # conv2 output channels
_F3 = 120      # fc3 width
_F4 = 84       # fc4 width
_NPAD = 128    # lane-dense padding of the final output
_LANE = 128    # lane alignment of in-kernel im2row / flatten scratch blocks


def _sigmoid(v):
    # sigmoid(x) = 0.5*(tanh(0.5*x)+1): one EUP op, no overflow issues.
    return 0.5 * (jnp.tanh(0.5 * v) + 1.0)


# ---------------------------------------------------------------------------
# Fused kernel: conv1 -> sigmoid -> pool1 -> conv2 -> sigmoid -> pool2 -> fc3/4/5
# ---------------------------------------------------------------------------
def _make_kernel(B, L, C, offs):
    PH = L // 2
    OH2 = PH - (_KS - 1)
    OW2 = C // 2 - (_KS - 1)
    NC1 = C * _C1          # conv1 output lane width (x*6 + oc)
    N2 = OW2 * _C2         # conv2 output lane width (x2*16 + oc)

    def kernel(xs1_ref, ca_ref, t2_ref, o_ref, xs2_scr, hf_scr):
        f32 = jnp.float32

        def cst(name, rows, cols):
            o = offs[name]
            return ca_ref[o:o + rows, 0:cols]

        # ---- conv1 (1->6, k=5, pad=2) + sigmoid: ONE matmul ----------------
        # xs1 rows = b*L + y, lanes = dy*C + xc (im2row done in the wrapper;
        # column zero padding already folded into the banded weight T1).
        t1 = cst("T1", _KS * C, NC1)
        h1 = _sigmoid(jnp.dot(xs1_ref[...], t1, preferred_element_type=f32)
                      + cst("b1", 1, NC1))                     # (B*L, C*6)

        # ---- pool1 rows (0.25 folded in); column sum is folded into T2 ----
        q1 = jnp.dot(cst("PL1", B * PH, B * L), h1,
                     preferred_element_type=f32)               # (B*PH, C*6)

        # ---- conv2 (6->16, k=5, valid) + sigmoid: ONE matmul ---------------
        # im2row into a 128-lane-aligned scratch: dy block at lanes dy*128.
        xs2_scr[...] = jnp.zeros_like(xs2_scr)
        for b in range(B):
            for dy in range(_KS):
                xs2_scr[b * OH2:(b + 1) * OH2,
                        dy * _LANE:dy * _LANE + NC1] = (
                    q1[b * PH + dy:b * PH + dy + OH2, :])
        h2 = _sigmoid(jnp.dot(xs2_scr[...], t2_ref[...],
                              preferred_element_type=f32)
                      + cst("b2", 1, N2))                      # (B*OH2, OW2*16)

        # ---- pool2 + Flatten + fc3 folded into ONE matmul ------------------
        # per-batch flatten of the OH2 rows into 128-lane-aligned blocks.
        hf_scr[...] = jnp.zeros_like(hf_scr)
        for b in range(B):
            for r in range(OH2):
                hf_scr[b:b + 1, r * _LANE:r * _LANE + N2] = (
                    h2[b * OH2 + r:b * OH2 + r + 1, :])
        f3 = _sigmoid(jnp.dot(hf_scr[...], cst("W3", OH2 * _LANE, _F3),
                              preferred_element_type=f32)
                      + cst("b3", 1, _F3))                     # (B, 120)

        # ---- fc4 + fc5 (output lane-padded to 128) --------------------------
        f4 = _sigmoid(jnp.dot(f3, cst("W4", _F3, _F4),
                              preferred_element_type=f32)
                      + cst("b4", 1, _F4))                     # (B, 84)
        o_ref[...] = (jnp.dot(f4, cst("W5", _F4, _NPAD),
                              preferred_element_type=f32)
                      + cst("b5", 1, _NPAD))                   # (B, 128)

    return kernel


# ---------------------------------------------------------------------------
# One-time (exact, elementwise) rearrangement of the PyTorch-layout params
# into the kernel's GEMM-friendly constants, packed into two arrays.
# ---------------------------------------------------------------------------
def _prepare_consts(p, B, L, C):
    f32 = jnp.float32
    PH, PW = L // 2, C // 2
    OH2, OW2 = PH - (_KS - 1), PW - (_KS - 1)
    QH, QW = OH2 // 2, OW2 // 2
    NC1 = C * _C1
    N2 = OW2 * _C2

    w1 = p["w1"].astype(f32)          # (6, 1, 5, 5)
    w2 = p["w2"].astype(f32)          # (16, 6, 5, 5)
    w3 = p["w3"].astype(f32)          # (120, 16*QH*QW)
    w4 = p["w4"].astype(f32)          # (84, 120)
    w5 = p["w5"].astype(f32)          # (1, 84)

    # conv1 banded weight (column zero-padding folded in):
    #   T1[dy*C + xc, x*6 + oc] = w1[oc, 0, dy, xc - x + 2]  (0 outside band)
    dx1 = jnp.arange(C)[:, None] - jnp.arange(C)[None, :] + (_KS // 2)  # (xc, x)
    g1 = w1[:, 0][:, :, jnp.clip(dx1, 0, _KS - 1)]                      # (oc,dy,xc,x)
    g1 = jnp.where(((dx1 >= 0) & (dx1 < _KS))[None, None], g1, 0.0)
    T1 = jnp.transpose(g1, (1, 2, 3, 0)).reshape(_KS * C, NC1)
    b1t = jnp.tile(p["b1"].astype(f32), C).reshape(1, NC1)

    # pool1 row matrix, block-diagonal over batch, 0.25 folded in.
    pr = 0.25 * (jnp.arange(L)[None, :] // 2
                 == jnp.arange(PH)[:, None]).astype(f32)                # (PH, L)
    PL1 = jnp.kron(jnp.eye(B, dtype=f32), pr)                           # (B*PH, B*L)

    # conv2 banded weight with pool1 column-sum folded in; dy blocks padded to
    # 128 K-rows to match the im2row scratch layout:
    #   T2[dy*128 + x*6 + ic, x2*16 + oc] = w2[oc, ic, dy, x//2 - x2]
    dx2 = jnp.arange(C)[:, None] // 2 - jnp.arange(OW2)[None, :]        # (x, x2)
    g2 = w2[:, :, :, jnp.clip(dx2, 0, _KS - 1)]                         # (oc,ic,dy,x,x2)
    g2 = jnp.where(((dx2 >= 0) & (dx2 < _KS))[None, None, None], g2, 0.0)
    t2core = jnp.transpose(g2, (2, 3, 1, 4, 0)).reshape(_KS, NC1, N2)   # (dy, x*6+ic, x2*16+oc)
    T2 = jnp.zeros((_KS * _LANE, N2), f32)
    for dy in range(_KS):
        T2 = T2.at[dy * _LANE:dy * _LANE + NC1, :].set(t2core[dy])
    b2t = jnp.tile(p["b2"].astype(f32), OW2).reshape(1, N2)

    # pool2 + Flatten (torch order: oc, yq, xq) + fc3 folded; y2 blocks padded
    # to 128 K-rows to match the flatten scratch layout:
    #   W3[y2*128 + x2*16 + oc, n] = 0.25 * w3[n, oc*QH*QW + (y2//2)*QW + x2//2]
    w3r = w3.reshape(_F3, _C2, QH, QW)
    wg = w3r[:, :, jnp.arange(OH2) // 2][:, :, :, jnp.arange(OW2) // 2]  # (n,oc,y2,x2)
    w3core = 0.25 * jnp.transpose(wg, (2, 3, 1, 0)).reshape(OH2, N2, _F3)
    W3 = jnp.zeros((OH2 * _LANE, _F3), f32)
    for y2 in range(OH2):
        W3 = W3.at[y2 * _LANE:y2 * _LANE + N2, :].set(w3core[y2])
    b3 = p["b3"].astype(f32).reshape(1, _F3)

    W4 = w4.T                                                           # (120, 84)
    b4 = p["b4"].astype(f32).reshape(1, _F4)
    W5 = jnp.zeros((_F4, _NPAD), f32).at[:, 0].set(w5[0])               # lane-dense fc5
    b5 = jnp.zeros((1, _NPAD), f32).at[0, 0].set(p["b5"].astype(f32)[0])

    # pack everything except T2 into a single (rows, 128) constant slab,
    # each block 8-row aligned so every in-kernel slice is tile-aligned.
    named = [("T1", T1), ("PL1", PL1), ("W3", W3), ("W4", W4), ("W5", W5),
             ("b1", b1t), ("b2", b2t), ("b3", b3), ("b4", b4), ("b5", b5)]
    offs, rows = {}, 0
    for name, m in named:
        offs[name] = rows
        rows += (m.shape[0] + 7) // 8 * 8
    ca = jnp.zeros((rows, _LANE), f32)
    for name, m in named:
        ca = ca.at[offs[name]:offs[name] + m.shape[0], :m.shape[1]].set(m)
    return ca, T2, offs


# ---------------------------------------------------------------------------
# Forward pass (mirrors LeNet.forward: x (B, L, C) -> (None, (B, 1)))
# ---------------------------------------------------------------------------
def lenet_forward(x, p):
    B, L, C = x.shape
    f32 = jnp.float32
    PH = L // 2
    OH2 = PH - (_KS - 1)

    # im2row for conv1 (row padding only; column padding lives inside T1):
    #   xs1[b*L + y, dy*C + xc] = x_row_padded[b, y + dy, xc]
    xpad = jnp.pad(x.astype(f32), ((0, 0), (2, 2), (0, 0)))             # (B, L+4, C)
    xs1 = jnp.concatenate([xpad[:, dy:dy + L, :] for dy in range(_KS)],
                          axis=-1).reshape(B * L, _KS * C)

    ca, t2, offs = _prepare_consts(p, B, L, C)
    kernel = _make_kernel(B, L, C, offs)

    out = pl.pallas_call(
        kernel,
        out_shape=jax.ShapeDtypeStruct((B, _NPAD), f32),
        in_specs=[pl.BlockSpec(xs1.shape, lambda: (0, 0)),
                  pl.BlockSpec(ca.shape, lambda: (0, 0)),
                  pl.BlockSpec(t2.shape, lambda: (0, 0))],
        out_specs=pl.BlockSpec((B, _NPAD), lambda: (0, 0)),
        scratch_shapes=[pltpu.VMEM((B * OH2, _KS * _LANE), f32),   # conv2 im2row
                        pltpu.VMEM((B, OH2 * _LANE), f32)],        # fc3 flatten
    )(xs1, ca, t2)

    return None, out[:, 0:1]                                            # (B, 1)


# ---------------------------------------------------------------------------
# Parameter init (PyTorch layouts) and pure-JAX reference for validation.
# ---------------------------------------------------------------------------
def init_params(key, input_len, num_features):
    flat = int((input_len // 4 - 2) * (num_features // 4 - 2) * 16)
    keys = jax.random.split(key, 10)
    s = 0.1
    return {
        "w1": s * jax.random.normal(keys[0], (6, 1, 5, 5), jnp.float32),
        "b1": s * jax.random.normal(keys[1], (6,), jnp.float32),
        "w2": s * jax.random.normal(keys[2], (16, 6, 5, 5), jnp.float32),
        "b2": s * jax.random.normal(keys[3], (16,), jnp.float32),
        "w3": s * jax.random.normal(keys[4], (120, flat), jnp.float32),
        "b3": s * jax.random.normal(keys[5], (120,), jnp.float32),
        "w4": s * jax.random.normal(keys[6], (84, 120), jnp.float32),
        "b4": s * jax.random.normal(keys[7], (84,), jnp.float32),
        "w5": s * jax.random.normal(keys[8], (1, 84), jnp.float32),
        "b5": s * jax.random.normal(keys[9], (1,), jnp.float32),
    }


def lenet_reference(x, p):
    B, L, C = x.shape
    xi = x.reshape(B, 1, L, C).astype(jnp.float32)
    dn = ("NCHW", "OIHW", "NCHW")
    y = lax.conv_general_dilated(xi, p["w1"], (1, 1), ((2, 2), (2, 2)),
                                 dimension_numbers=dn)
    y = jax.nn.sigmoid(y + p["b1"][None, :, None, None])
    y = y.reshape(B, 6, L // 2, 2, C // 2, 2).mean(axis=(3, 5))
    y = lax.conv_general_dilated(y, p["w2"], (1, 1), "VALID", dimension_numbers=dn)
    y = jax.nn.sigmoid(y + p["b2"][None, :, None, None])
    oh, ow = y.shape[2], y.shape[3]
    y = y.reshape(B, 16, oh // 2, 2, ow // 2, 2).mean(axis=(3, 5))
    flat = y.reshape(B, -1)
    h = jax.nn.sigmoid(flat @ p["w3"].T + p["b3"])
    h = jax.nn.sigmoid(h @ p["w4"].T + p["b4"])
    return h @ p["w5"].T + p["b5"]


if __name__ == "__main__":
    import numpy as np

    B, L, C = 2, 16, 16   # input_len=16, num_features=16 -> flatten dim 64
    key = jax.random.PRNGKey(0)
    kx, kp = jax.random.split(key)
    x = jax.random.normal(kx, (B, L, C), jnp.float32)
    params = init_params(kp, L, C)

    fwd = jax.jit(lenet_forward)
    _, out = fwd(x, params)
    out = jax.block_until_ready(out)
    assert out.shape == (B, 1)

    ref = lenet_reference(x, params)
    np.testing.assert_allclose(np.asarray(out), np.asarray(ref),
                               rtol=5e-4, atol=5e-4)
    print("KERNEL_OK")
</pallas_src>

<mosaic_0001>
module attributes {stable_mosaic.version = 11 : i64} {
  func.func @kernel(%arg0: memref<32x80xf32, #tpu.memory_space<vmem>>, %arg1: memref<856x128xf32, #tpu.memory_space<vmem>>, %arg2: memref<640x64xf32, #tpu.memory_space<vmem>>, %arg3: memref<2x128xf32, #tpu.memory_space<vmem>>, %arg4: memref<8x640xf32, #tpu.memory_space<vmem>>, %arg5: memref<2x512xf32, #tpu.memory_space<vmem>>) attributes {dimension_semantics = [], scalar_prefetch = 0 : i64, scratch_operands = 2 : i64, tpu.core_type = #tpu.core_type<tc>} {
    %c0 = arith.constant 0 : index
    %c0_0 = arith.constant 0 : index
    %0 = vector.load %arg1[%c0, %c0_0] : memref<856x128xf32, #tpu.memory_space<vmem>>, vector<80x96xf32>
    %c0_1 = arith.constant 0 : index
    %c0_2 = arith.constant 0 : index
    %1 = vector.load %arg0[%c0_1, %c0_2] : memref<32x80xf32, #tpu.memory_space<vmem>>, vector<32x80xf32>
    %cst = arith.constant dense<0.000000e+00> : vector<32x96xf32>
    %2 = tpu.matmul %1, %0, %cst {dimension_numbers = #tpu.dot_dimension_numbers<[1], [0], [0], [1], [0, 0, 1, 1], [], []>} : vector<32x80xf32>, vector<80x96xf32>, vector<32x96xf32> -> vector<32x96xf32>
    %c816 = arith.constant 816 : index
    %c0_3 = arith.constant 0 : index
    %3 = vector.load %arg1[%c816, %c0_3] : memref<856x128xf32, #tpu.memory_space<vmem>>, vector<1x96xf32>
    %4 = vector.broadcast %3 : vector<1x96xf32> to vector<32x96xf32>
    %5 = arith.addf %2, %4 : vector<32x96xf32>
    %cst_4 = arith.constant 5.000000e-01 : f32
    %6 = vector.broadcast %cst_4 : f32 to vector<32x96xf32>
    %7 = arith.mulf %6, %5 : vector<32x96xf32>
    %8 = math.tanh %7 : vector<32x96xf32>
    %cst_5 = arith.constant 1.000000e+00 : f32
    %9 = vector.broadcast %cst_5 : f32 to vector<32x96xf32>
    %10 = arith.addf %8, %9 : vector<32x96xf32>
    %cst_6 = arith.constant 5.000000e-01 : f32
    %11 = vector.broadcast %cst_6 : f32 to vector<32x96xf32>
    %12 = arith.mulf %11, %10 : vector<32x96xf32>
    %c80 = arith.constant 80 : index
    %c0_7 = arith.constant 0 : index
    %13 = vector.load %arg1[%c80, %c0_7] : memref<856x128xf32, #tpu.memory_space<vmem>>, vector<16x32xf32>
    %cst_8 = arith.constant dense<0.000000e+00> : vector<16x96xf32>
    %14 = tpu.matmul %13, %12, %cst_8 {dimension_numbers = #tpu.dot_dimension_numbers<[1], [0], [0], [1], [0, 0, 1, 1], [], []>} : vector<16x32xf32>, vector<32x96xf32>, vector<16x96xf32> -> vector<16x96xf32>
    %cst_9 = arith.constant 0.000000e+00 : f32
    %15 = vector.broadcast %cst_9 : f32 to vector<8x640xf32>
    %c0_10 = arith.constant 0 : index
    %c0_11 = arith.constant 0 : index
    %16 = vector.load %arg4[%c0_10, %c0_11] : memref<8x640xf32, #tpu.memory_space<vmem>>, vector<8x640xf32>
    tpu.vector_store %arg4[%c0_10, %c0_11], %15 {strides = array<i32>} : memref<8x640xf32, #tpu.memory_space<vmem>>, vector<8x640xf32>,
    %17 = vector.extract_strided_slice %14 {offsets = [0, 0], sizes = [4, 96], strides = [1, 1]} : vector<16x96xf32> to vector<4x96xf32>
    %c0_12 = arith.constant 0 : index
    %c0_13 = arith.constant 0 : index
    %18 = vector.load %arg4[%c0_12, %c0_13] : memref<8x640xf32, #tpu.memory_space<vmem>>, vector<4x96xf32>
    tpu.vector_store %arg4[%c0_12, %c0_13], %17 {strides = array<i32>} : memref<8x640xf32, #tpu.memory_space<vmem>>, vector<4x96xf32>,
    %19 = vector.extract_strided_slice %14 {offsets = [1, 0], sizes = [4, 96], strides = [1, 1]} : vector<16x96xf32> to vector<4x96xf32>
    %c0_14 = arith.constant 0 : index
    %c128 = arith.constant 128 : index
    %20 = vector.load %arg4[%c0_14, %c128] : memref<8x640xf32, #tpu.memory_space<vmem>>, vector<4x96xf32>
    tpu.vector_store %arg4[%c0_14, %c128], %19 {strides = array<i32>} : memref<8x640xf32, #tpu.memory_space<vmem>>, vector<4x96xf32>,
    %21 = vector.extract_strided_slice %14 {offsets = [2, 0], sizes = [4, 96], strides = [1, 1]} : vector<16x96xf32> to vector<4x96xf32>
    %c0_15 = arith.constant 0 : index
    %c256 = arith.constant 256 : index
    %22 = vector.load %arg4[%c0_15, %c256] : memref<8x640xf32, #tpu.memory_space<vmem>>, vector<4x96xf32>
    tpu.vector_store %arg4[%c0_15, %c256], %21 {strides = array<i32>} : memref<8x640xf32, #tpu.memory_space<vmem>>, vector<4x96xf32>,
    %23 = vector.extract_strided_slice %14 {offsets = [3, 0], sizes = [4, 96], strides = [1, 1]} : vector<16x96xf32> to vector<4x96xf32>
    %c0_16 = arith.constant 0 : index
    %c384 = arith.constant 384 : index
    %24 = vector.load %arg4[%c0_16, %c384] : memref<8x640xf32, #tpu.memory_space<vmem>>, vector<4x96xf32>
    tpu.vector_store %arg4[%c0_16, %c384], %23 {strides = array<i32>} : memref<8x640xf32, #tpu.memory_space<vmem>>, vector<4x96xf32>,
    %25 = vector.extract_strided_slice %14 {offsets = [4, 0], sizes = [4, 96], strides = [1, 1]} : vector<16x96xf32> to vector<4x96xf32>
    %c0_17 = arith.constant 0 : index
    %c512 = arith.constant 512 : index
    %26 = vector.load %arg4[%c0_17, %c512] : memref<8x640xf32, #tpu.memory_space<vmem>>, vector<4x96xf32>
    tpu.vector_store %arg4[%c0_17, %c512], %25 {strides = array<i32>} : memref<8x640xf32, #tpu.memory_space<vmem>>, vector<4x96xf32>,
    %27 = vector.extract_strided_slice %14 {offsets = [8, 0], sizes = [4, 96], strides = [1, 1]} : vector<16x96xf32> to vector<4x96xf32>
    %c4 = arith.constant 4 : index
    %c0_18 = arith.constant 0 : index
    %28 = vector.load %arg4[%c4, %c0_18] : memref<8x640xf32, #tpu.memory_space<vmem>>, vector<4x96xf32>
    tpu.vector_store %arg4[%c4, %c0_18], %27 {strides = array<i32>} : memref<8x640xf32, #tpu.memory_space<vmem>>, vector<4x96xf32>,
    %29 = vector.extract_strided_slice %14 {offsets = [9, 0], sizes = [4, 96], strides = [1, 1]} : vector<16x96xf32> to vector<4x96xf32>
    %c4_19 = arith.constant 4 : index
    %c128_20 = arith.constant 128 : index
    %30 = vector.load %arg4[%c4_19, %c128_20] : memref<8x640xf32, #tpu.memory_space<vmem>>, vector<4x96xf32>
    tpu.vector_store %arg4[%c4_19, %c128_20], %29 {strides = array<i32>} : memref<8x640xf32, #tpu.memory_space<vmem>>, vector<4x96xf32>,
    %31 = vector.extract_strided_slice %14 {offsets = [10, 0], sizes = [4, 96], strides = [1, 1]} : vector<16x96xf32> to vector<4x96xf32>
    %c4_21 = arith.constant 4 : index
    %c256_22 = arith.constant 256 : index
    %32 = vector.load %arg4[%c4_21, %c256_22] : memref<8x640xf32, #tpu.memory_space<vmem>>, vector<4x96xf32>
    tpu.vector_store %arg4[%c4_21, %c256_22], %31 {strides = array<i32>} : memref<8x640xf32, #tpu.memory_space<vmem>>, vector<4x96xf32>,
    %33 = vector.extract_strided_slice %14 {offsets = [11, 0], sizes = [4, 96], strides = [1, 1]} : vector<16x96xf32> to vector<4x96xf32>
    %c4_23 = arith.constant 4 : index
    %c384_24 = arith.constant 384 : index
    %34 = vector.load %arg4[%c4_23, %c384_24] : memref<8x640xf32, #tpu.memory_space<vmem>>, vector<4x96xf32>
    tpu.vector_store %arg4[%c4_23, %c384_24], %33 {strides = array<i32>} : memref<8x640xf32, #tpu.memory_space<vmem>>, vector<4x96xf32>,
    %35 = vector.extract_strided_slice %14 {offsets = [12, 0], sizes = [4, 96], strides = [1, 1]} : vector<16x96xf32> to vector<4x96xf32>
    %c4_25 = arith.constant 4 : index
    %c512_26 = arith.constant 512 : index
    %36 = vector.load %arg4[%c4_25, %c512_26] : memref<8x640xf32, #tpu.memory_space<vmem>>, vector<4x96xf32>
    tpu.vector_store %arg4[%c4_25, %c512_26], %35 {strides = array<i32>} : memref<8x640xf32, #tpu.memory_space<vmem>>, vector<4x96xf32>,
    %c0_27 = arith.constant 0 : index
    %c0_28 = arith.constant 0 : index
    %37 = vector.load %arg4[%c0_27, %c0_28] : memref<8x640xf32, #tpu.memory_space<vmem>>, vector<8x640xf32>
    %c0_29 = arith.constant 0 : index
    %c0_30 = arith.constant 0 : index
    %38 = vector.load %arg2[%c0_29, %c0_30] : memref<640x64xf32, #tpu.memory_space<vmem>>, vector<640x64xf32>
    %cst_31 = arith.constant dense<0.000000e+00> : vector<8x64xf32>
    %39 = tpu.matmul %37, %38, %cst_31 {dimension_numbers = #tpu.dot_dimension_numbers<[1], [0], [0], [1], [0, 0, 1, 1], [], []>} : vector<8x640xf32>, vector<640x64xf32>, vector<8x64xf32> -> vector<8x64xf32>
    %c824 = arith.constant 824 : index
    %c0_32 = arith.constant 0 : index
    %40 = vector.load %arg1[%c824, %c0_32] : memref<856x128xf32, #tpu.memory_space<vmem>>, vector<1x64xf32>
    %41 = vector.broadcast %40 : vector<1x64xf32> to vector<8x64xf32>
    %42 = arith.addf %39, %41 : vector<8x64xf32>
    %cst_33 = arith.constant 5.000000e-01 : f32
    %43 = vector.broadcast %cst_33 : f32 to vector<8x64xf32>
    %44 = arith.mulf %43, %42 : vector<8x64xf32>
    %45 = math.tanh %44 : vector<8x64xf32>
    %cst_34 = arith.constant 1.000000e+00 : f32
    %46 = vector.broadcast %cst_34 : f32 to vector<8x64xf32>
    %47 = arith.addf %45, %46 : vector<8x64xf32>
    %cst_35 = arith.constant 5.000000e-01 : f32
    %48 = vector.broadcast %cst_35 : f32 to vector<8x64xf32>
    %49 = arith.mulf %48, %47 : vector<8x64xf32>
    %cst_36 = arith.constant 0.000000e+00 : f32
    %50 = vector.broadcast %cst_36 : f32 to vector<2x512xf32>
    %c0_37 = arith.constant 0 : index
    %c0_38 = arith.constant 0 : index
    %51 = vector.load %arg5[%c0_37, %c0_38] : memref<2x512xf32, #tpu.memory_space<vmem>>, vector<2x512xf32>
    tpu.vector_store %arg5[%c0_37, %c0_38], %50 {strides = array<i32>} : memref<2x512xf32, #tpu.memory_space<vmem>>, vector<2x512xf32>,
    %52 = vector.extract_strided_slice %49 {offsets = [0, 0], sizes = [1, 64], strides = [1, 1]} : vector<8x64xf32> to vector<1x64xf32>
    %c0_39 = arith.constant 0 : index
    %c0_40 = arith.constant 0 : index
    %53 = vector.load %arg5[%c0_39, %c0_40] : memref<2x512xf32, #tpu.memory_space<vmem>>, vector<1x64xf32>
    tpu.vector_store %arg5[%c0_39, %c0_40], %52 {strides = array<i32>} : memref<2x512xf32, #tpu.memory_space<vmem>>, vector<1x64xf32>,
    %54 = vector.extract_strided_slice %49 {offsets = [1, 0], sizes = [1, 64], strides = [1, 1]} : vector<8x64xf32> to vector<1x64xf32>
    %c0_41 = arith.constant 0 : index
    %c128_42 = arith.constant 128 : index
    %55 = vector.load %arg5[%c0_41, %c128_42] : memref<2x512xf32, #tpu.memory_space<vmem>>, vector<1x64xf32>
    tpu.vector_store %arg5[%c0_41, %c128_42], %54 {strides = array<i32>} : memref<2x512xf32, #tpu.memory_space<vmem>>, vector<1x64xf32>,
    %56 = vector.extract_strided_slice %49 {offsets = [2, 0], sizes = [1, 64], strides = [1, 1]} : vector<8x64xf32> to vector<1x64xf32>
    %c0_43 = arith.constant 0 : index
    %c256_44 = arith.constant 256 : index
    %57 = vector.load %arg5[%c0_43, %c256_44] : memref<2x512xf32, #tpu.memory_space<vmem>>, vector<1x64xf32>
    tpu.vector_store %arg5[%c0_43, %c256_44], %56 {strides = array<i32>} : memref<2x512xf32, #tpu.memory_space<vmem>>, vector<1x64xf32>,
    %58 = vector.extract_strided_slice %49 {offsets = [3, 0], sizes = [1, 64], strides = [1, 1]} : vector<8x64xf32> to vector<1x64xf32>
    %c0_45 = arith.constant 0 : index
    %c384_46 = arith.constant 384 : index
    %59 = vector.load %arg5[%c0_45, %c384_46] : memref<2x512xf32, #tpu.memory_space<vmem>>, vector<1x64xf32>
    tpu.vector_store %arg5[%c0_45, %c384_46], %58 {strides = array<i32>} : memref<2x512xf32, #tpu.memory_space<vmem>>, vector<1x64xf32>,
    %60 = vector.extract_strided_slice %49 {offsets = [4, 0], sizes = [1, 64], strides = [1, 1]} : vector<8x64xf32> to vector<1x64xf32>
    %c1 = arith.constant 1 : index
    %c0_47 = arith.constant 0 : index
    %61 = vector.load %arg5[%c1, %c0_47] : memref<2x512xf32, #tpu.memory_space<vmem>>, vector<1x64xf32>
    tpu.vector_store %arg5[%c1, %c0_47], %60 {strides = array<i32>} : memref<2x512xf32, #tpu.memory_space<vmem>>, vector<1x64xf32>,
    %62 = vector.extract_strided_slice %49 {offsets = [5, 0], sizes = [1, 64], strides = [1, 1]} : vector<8x64xf32> to vector<1x64xf32>
    %c1_48 = arith.constant 1 : index
    %c128_49 = arith.constant 128 : index
    %63 = vector.load %arg5[%c1_48, %c128_49] : memref<2x512xf32, #tpu.memory_space<vmem>>, vector<1x64xf32>
    tpu.vector_store %arg5[%c1_48, %c128_49], %62 {strides = array<i32>} : memref<2x512xf32, #tpu.memory_space<vmem>>, vector<1x64xf32>,
    %64 = vector.extract_strided_slice %49 {offsets = [6, 0], sizes = [1, 64], strides = [1, 1]} : vector<8x64xf32> to vector<1x64xf32>
    %c1_50 = arith.constant 1 : index
    %c256_51 = arith.constant 256 : index
    %65 = vector.load %arg5[%c1_50, %c256_51] : memref<2x512xf32, #tpu.memory_space<vmem>>, vector<1x64xf32>
    tpu.vector_store %arg5[%c1_50, %c256_51], %64 {strides = array<i32>} : memref<2x512xf32, #tpu.memory_space<vmem>>, vector<1x64xf32>,
    %66 = vector.extract_strided_slice %49 {offsets = [7, 0], sizes = [1, 64], strides = [1, 1]} : vector<8x64xf32> to vector<1x64xf32>
    %c1_52 = arith.constant 1 : index
    %c384_53 = arith.constant 384 : index
    %67 = vector.load %arg5[%c1_52, %c384_53] : memref<2x512xf32, #tpu.memory_space<vmem>>, vector<1x64xf32>
    tpu.vector_store %arg5[%c1_52, %c384_53], %66 {strides = array<i32>} : memref<2x512xf32, #tpu.memory_space<vmem>>, vector<1x64xf32>,
    %c0_54 = arith.constant 0 : index
    %c0_55 = arith.constant 0 : index
    %68 = vector.load %arg5[%c0_54, %c0_55] : memref<2x512xf32, #tpu.memory_space<vmem>>, vector<2x512xf32>
    %c96 = arith.constant 96 : index
    %c0_56 = arith.constant 0 : index
    %69 = vector.load %arg1[%c96, %c0_56] : memref<856x128xf32, #tpu.memory_space<vmem>>, vector<512x120xf32>
    %cst_57 = arith.constant dense<0.000000e+00> : vector<2x120xf32>
    %70 = tpu.matmul %68, %69, %cst_57 {dimension_numbers = #tpu.dot_dimension_numbers<[1], [0], [0], [1], [0, 0, 1, 1], [], []>} : vector<2x512xf32>, vector<512x120xf32>, vector<2x120xf32> -> vector<2x120xf32>
    %c832 = arith.constant 832 : index
    %c0_58 = arith.constant 0 : index
    %71 = vector.load %arg1[%c832, %c0_58] : memref<856x128xf32, #tpu.memory_space<vmem>>, vector<1x120xf32>
    %72 = vector.broadcast %71 : vector<1x120xf32> to vector<2x120xf32>
    %73 = arith.addf %70, %72 : vector<2x120xf32>
    %cst_59 = arith.constant 5.000000e-01 : f32
    %74 = vector.broadcast %cst_59 : f32 to vector<2x120xf32>
    %75 = arith.mulf %74, %73 : vector<2x120xf32>
    %76 = math.tanh %75 : vector<2x120xf32>
    %cst_60 = arith.constant 1.000000e+00 : f32
    %77 = vector.broadcast %cst_60 : f32 to vector<2x120xf32>
    %78 = arith.addf %76, %77 : vector<2x120xf32>
    %cst_61 = arith.constant 5.000000e-01 : f32
    %79 = vector.broadcast %cst_61 : f32 to vector<2x120xf32>
    %80 = arith.mulf %79, %78 : vector<2x120xf32>
    %c608 = arith.constant 608 : index
    %c0_62 = arith.constant 0 : index
    %81 = vector.load %arg1[%c608, %c0_62] : memref<856x128xf32, #tpu.memory_space<vmem>>, vector<120x84xf32>
    %cst_63 = arith.constant dense<0.000000e+00> : vector<2x84xf32>
    %82 = tpu.matmul %80, %81, %cst_63 {dimension_numbers = #tpu.dot_dimension_numbers<[1], [0], [0], [1], [0, 0, 1, 1], [], []>} : vector<2x120xf32>, vector<120x84xf32>, vector<2x84xf32> -> vector<2x84xf32>
    %c840 = arith.constant 840 : index
    %c0_64 = arith.constant 0 : index
    %83 = vector.load %arg1[%c840, %c0_64] : memref<856x128xf32, #tpu.memory_space<vmem>>, vector<1x84xf32>
    %84 = vector.broadcast %83 : vector<1x84xf32> to vector<2x84xf32>
    %85 = arith.addf %82, %84 : vector<2x84xf32>
    %cst_65 = arith.constant 5.000000e-01 : f32
    %86 = vector.broadcast %cst_65 : f32 to vector<2x84xf32>
    %87 = arith.mulf %86, %85 : vector<2x84xf32>
    %88 = math.tanh %87 : vector<2x84xf32>
    %cst_66 = arith.constant 1.000000e+00 : f32
    %89 = vector.broadcast %cst_66 : f32 to vector<2x84xf32>
    %90 = arith.addf %88, %89 : vector<2x84xf32>
    %cst_67 = arith.constant 5.000000e-01 : f32
    %91 = vector.broadcast %cst_67 : f32 to vector<2x84xf32>
    %92 = arith.mulf %91, %90 : vector<2x84xf32>
    %c728 = arith.constant 728 : index
    %c0_68 = arith.constant 0 : index
    %93 = vector.load %arg1[%c728, %c0_68] : memref<856x128xf32, #tpu.memory_space<vmem>>, vector<84x128xf32>
    %cst_69 = arith.constant dense<0.000000e+00> : vector<2x128xf32>
    %94 = tpu.matmul %92, %93, %cst_69 {dimension_numbers = #tpu.dot_dimension_numbers<[1], [0], [0], [1], [0, 0, 1, 1], [], []>} : vector<2x84xf32>, vector<84x128xf32>, vector<2x128xf32> -> vector<2x128xf32>
    %c848 = arith.constant 848 : index
    %c0_70 = arith.constant 0 : index
    %95 = vector.load %arg1[%c848, %c0_70] : memref<856x128xf32, #tpu.memory_space<vmem>>, vector<1x128xf32>
    %96 = vector.broadcast %95 : vector<1x128xf32> to vector<2x128xf32>
    %97 = arith.addf %94, %96 : vector<2x128xf32>
    %c0_71 = arith.constant 0 : index
    %c0_72 = arith.constant 0 : index
    %98 = vector.load %arg3[%c0_71, %c0_72] : memref<2x128xf32, #tpu.memory_space<vmem>>, vector<2x128xf32>
    tpu.vector_store %arg3[%c0_71, %c0_72], %97 {strides = array<i32>} : memref<2x128xf32, #tpu.memory_space<vmem>>, vector<2x128xf32>,
    return
  }
}

</mosaic_0001>

<llo_original>
// kernel: tile.13
$region0: #{tile.13}
  #allocation0 [shape = 's32[1]{0}', space=sflag, size = 0x4, scoped, tag = 'scoped memory for tile.13']
  %s0 = inlined_call_operand.vmem [shape: f32[6], index: 0, kind: input, shape index: {}]
  %s1 = inlined_call_operand.vmem [shape: f32[16,6], index: 1, kind: output, shape index: {}]
  // Predicated region
  $region2: #{tile.13} parent=0 // pred_check
    _
  $region3: #{tile.13} parent=0 // pred_check_branch
    %3 = sbr.rel (0) target = $region5
  $region4: #{tile.13} parent=0 // pred_region
    _
  $region5: #{tile.13} parent=0 // pred_fallthru
    _
  %v4 = vld [vmem:[%s0] ss:$0 sm:$0xff]
  %5 = vst [vmem:[%s1] sm:$0xff] %v4
  %s6 = scalar_lea.vmem %s1, 8
  %7 = vst [vmem:[%s6] sm:$0xff] %v4

// kernel: tile.18
$region0: #{tile.18}
  #allocation0 [shape = 's32[1]{0}', space=sflag, size = 0x4, scoped, tag = 'scoped memory for tile.18']
  %s0 = inlined_call_operand.vmem [shape: f32[16], index: 0, kind: input, shape index: {}]
  %s1 = inlined_call_operand.vmem [shape: f32[4,16], index: 1, kind: output, shape index: {}]
  // Predicated region
  $region2: #{tile.18} parent=0 // pred_check
    _
  $region3: #{tile.18} parent=0 // pred_check_branch
    %3 = sbr.rel (0) target = $region5
  $region4: #{tile.18} parent=0 // pred_region
    _
  $region5: #{tile.18} parent=0 // pred_fallthru
    _
  %v4 = vld [vmem:[%s0] ss:$0 sm:$0xff]
  %5 = vst [vmem:[%s1] sm:$0xf] %v4

// kernel: lenet_forward.1
$region0: #{lenet_forward.1}
  #allocation0 [shape = 'u32[]', space=smem, size = 0x4, offset = 0x4, fixed_abs, tag = 'smem constant byte address 0x4 - core index']
  #allocation1 [shape = 'u32[144,128]{1,0:T(1,128)}', space=vmem, size = 0x12000, scoped, tag = 'internal scratch']
  #allocation2 [shape = 'f32[8,640]{1,0:T(8,128)}', space=vmem, size = 0x5000, scoped, tag = 'scratch operand']
  #allocation3 [shape = 'f32[2,512]{1,0:T(2,128)}', space=vmem, size = 0x1000, scoped, tag = 'scratch operand']
  %s0 = inlined_call_operand.vmem [shape: f32[32,80], index: 0, kind: input, shape index: {}]
  %s1 = inlined_call_operand.vmem [shape: f32[856,128], index: 1, kind: input, shape index: {}]
  %s2 = inlined_call_operand.vmem [shape: f32[640,64], index: 2, kind: input, shape index: {}]
  %s3 = inlined_call_operand.vmem [shape: f32[2,128], index: 3, kind: output, shape index: {}]
  %s4 = sld [smem:[#allocation0]]
  $region22: #{lenet_forward.1} parent=0
    _
  %s6 = ssub.s32 1, %s4
  %s7 = scalar_select 0, %s6, %s4
  // Predicated region
  $region2: #{lenet_forward.1} parent=0 // pred_check
    _
  $region3: #{lenet_forward.1} parent=0 // pred_check_branch
    %9 = sbr.rel (0) target = $region5
  $region4: #{lenet_forward.1} parent=0 // pred_region
    _
  $region5: #{lenet_forward.1} parent=0 // pred_fallthru
    _
  // Predicated region
  $region6: #{lenet_forward.1} parent=0 // pred_check
    _
  $region7: #{lenet_forward.1} parent=0 // pred_check_branch
    %11 = sbr.rel (0) target = $region9
  $region8: #{lenet_forward.1} parent=0 // pred_region
    _
  $region9: #{lenet_forward.1} parent=0 // pred_fallthru
    _
  // Predicated region
  $region10: #{lenet_forward.1} parent=0 // pred_check
    _
  $region11: #{lenet_forward.1} parent=0 // pred_check_branch
    %13 = sbr.rel (0) target = $region13
  $region12: #{lenet_forward.1} parent=0 // pred_region
    _
  $region13: #{lenet_forward.1} parent=0 // pred_fallthru
    _
  %v14 = vld [vmem:[%s1] sm:$0xff]
  %v15 = vld [vmem:[%s1 + $0x8] sm:$0xff]
  %v16 = vld [vmem:[%s1 + $0x10] sm:$0xff]
  %v17 = vld [vmem:[%s1 + $0x18] sm:$0xff]
  %v18 = vld [vmem:[%s1 + $0x20] sm:$0xff]
  %v19 = vld [vmem:[%s1 + $0x28] sm:$0xff]
  %v20 = vld [vmem:[%s1 + $0x30] sm:$0xff]
  %v21 = vld [vmem:[%s1 + $0x38] sm:$0xff]
  %v22 = vld [vmem:[%s1 + $0x40] sm:$0xff]
  %v23 = vld [vmem:[%s1 + $0x48] sm:$0xff]
  %v24 = vld [vmem:[%s0] sm:$0xff]
  %v25 = vld [vmem:[%s0 + $0x8] sm:$0xff]
  %v26 = vld [vmem:[%s0 + $0x10] sm:$0xff]
  %v27 = vld [vmem:[%s0 + $0x18] sm:$0xff]
  %v28 = vld [vmem:[%s1 + $0x330] sm:$0x1]
  %v29 = vlaneseq
  %v30 = vshrl.u32 %v29, 7
  %v31 = vsub.s32 0, %v30
  %v32 = vrot.slane %v28, %v31
  %vm33 = vcmask 654336
  %v35 = vsel %vm33, %v24, 0
  %v38 = vsel %vm33, %v25, 0
  %v41 = vsel %vm33, %v26, 0
  %v44 = vsel %vm33, %v27, 0
  %46 = vmatprep.subr.mxu0 0.0
  %47 = vmatpush1.msra.mxu0 0.0
  %48 = vmatprep.subr.mxu0 0.0
  %49 = vmatpush1.msra.mxu0 0.0
  %50 = vmatprep.subr.mxu0 0.0
  %51 = vmatpush1.msra.mxu0 0.0
  %52 = vmatprep.subr.mxu0 0.0
  %53 = vmatpush1.msra.mxu0 0.0
  %54 = vmatprep.subr.mxu0 0.0
  %55 = vmatpush1.msra.mxu0 0.0
  %56 = vmatprep.subr.mxu0 0.0
  %57 = vmatpush1.msra.mxu0 0.0
  %58 = vmatprep.subr.mxu0 0.0
  %59 = vmatpush1.msra.mxu0 %v23
  %60 = vmatprep.subr.mxu0 0.0
  %61 = vmatpush1.msra.mxu0 %v22
  %62 = vmatprep.subr.mxu0 0.0
  %63 = vmatpush1.msra.mxu0 %v21
  %64 = vmatprep.subr.mxu0 0.0
  %65 = vmatpush1.msra.mxu0 %v20
  %66 = vmatprep.subr.mxu0 0.0
  %67 = vmatpush1.msra.mxu0 %v19
  %68 = vmatprep.subr.mxu0 0.0
  %69 = vmatpush1.msra.mxu0 %v18
  %70 = vmatprep.subr.mxu0 0.0
  %71 = vmatpush1.msra.mxu0 %v17
  %72 = vmatprep.subr.mxu0 0.0
  %73 = vmatpush1.msra.mxu0 %v16
  %74 = vmatprep.subr.mxu0 0.0
  %75 = vmatpush1.msra.mxu0 %v15
  %76 = vmatprep.subr.mxu0 0.0
  %77 = vmatpush1.msra.mxu0 %v14
  %78 = vmatprep.subr.mxu0 0.0
  %79 = vmatpush2.msra.mxu0 0.0
  %80 = vmatprep.subr.mxu0 0.0
  %81 = vmatpush2.msra.mxu0 0.0
  %82 = vmatprep.subr.mxu0 0.0
  %83 = vmatpush2.msra.mxu0 0.0
  %84 = vmatprep.subr.mxu0 0.0
  %85 = vmatpush2.msra.mxu0 0.0
  %86 = vmatprep.subr.mxu0 0.0
  %87 = vmatpush2.msra.mxu0 0.0
  %88 = vmatprep.subr.mxu0 0.0
  %89 = vmatpush2.msra.mxu0 0.0
  %90 = vmatprep.subr.mxu0 0.0
  %91 = vmatpush2.msra.mxu0 0.0
  %92 = vmatprep.subr.mxu0 0.0
  %93 = vmatpush2.msra.mxu0 0.0
  %94 = vmatprep.subr.mxu0 0.0
  %95 = vmatpush2.msra.mxu0 0.0
  %96 = vmatprep.subr.mxu0 0.0
  %97 = vmatpush2.msra.mxu0 0.0
  %98 = vmatprep.subr.mxu0 0.0
  %99 = vmatpush2.msra.mxu0 0.0
  %100 = vmatprep.subr.mxu0 0.0
  %101 = vmatpush2.msra.mxu0 0.0
  %102 = vmatprep.subr.mxu0 0.0
  %103 = vmatpush2.msra.mxu0 0.0
  %104 = vmatprep.subr.mxu0 0.0
  %105 = vmatpush2.msra.mxu0 0.0
  %106 = vmatprep.subr.mxu0 0.0
  %107 = vmatpush2.msra.mxu0 0.0
  %108 = vmatprep.subr.mxu0 0.0
  %109 = vmatpush2.msra.mxu0 0.0
  %110 = vmatprep.mubr.f32.mxu0 0.0
  %111 = vmatmul.mubr.f32.gmra.mxu0 %v35
  %v112 = vpop.f32.mrf.mxu0
  %v113 = vadd.f32 %v32, %v112
  %v114 = vpop.f32.mrf.mxu0
  %115 = vmatprep.mubr.f32.mxu0 0.0
  %116 = vmatmul.mubr.f32.gmra.mxu0 %v38
  %v117 = vpop.f32.mrf.mxu0
  %v118 = vadd.f32 %v32, %v117
  %v119 = vpop.f32.mrf.mxu0
  %120 = vmatprep.mubr.f32.mxu0 0.0
  %121 = vmatmul.mubr.f32.gmra.mxu0 %v41
  %v122 = vpop.f32.mrf.mxu0
  %v123 = vadd.f32 %v32, %v122
  %v124 = vpop.f32.mrf.mxu0
  %125 = vmatprep.mubr.f32.mxu0 0.0
  %126 = vmatmul.mubr.f32.gmra.mxu0 %v44
  %v127 = vpop.f32.mrf.mxu0
  %v128 = vadd.f32 %v32, %v127
  %v129 = vpop.f32.mrf.mxu0
  %130 = vdwg.mxu0
  %v131 = vmul.f32 %v113, 0.5
  %v132 = vmul.f32 %v118, 0.5
  %v133 = vmul.f32 %v123, 0.5
  %v134 = vmul.f32 %v128, 0.5
  %v135 = vtanh.pop %v131
  %v136 = vtanh.pop %v132
  %v137 = vtanh.pop %v133
  %v138 = vtanh.pop %v134
  %v139 = vadd.f32 %v135, 1.0
  %v140 = vadd.f32 %v136, 1.0
  %v141 = vadd.f32 %v137, 1.0
  %v142 = vadd.f32 %v138, 1.0
  %v143 = vmul.f32 %v139, 0.5
  %v144 = vmul.f32 %v140, 0.5
  %v145 = vmul.f32 %v141, 0.5
  %v146 = vmul.f32 %v142, 0.5
  %v147 = vld [vmem:[%s1 + $0x50] sm:$0xff]
  %v148 = vld [vmem:[%s1 + $0x58] sm:$0xff]
  %vm149 = vcmask 261120
  %v151 = vsel %vm149, %v147, 0
  %v154 = vsel %vm149, %v148, 0
  %156 = vmatprep.subr.mxu0 0.0
  %157 = vmatpush1.msra.mxu0 0.0
  %158 = vmatprep.subr.mxu0 0.0
  %159 = vmatpush1.msra.mxu0 0.0
  %160 = vmatprep.subr.mxu0 0.0
  %161 = vmatpush1.msra.mxu0 0.0
  %162 = vmatprep.subr.mxu0 0.0
  %163 = vmatpush1.msra.mxu0 0.0
  %164 = vmatprep.subr.mxu0 0.0
  %165 = vmatpush1.msra.mxu0 0.0
  %166 = vmatprep.subr.mxu0 0.0
  %167 = vmatpush1.msra.mxu0 0.0
  %168 = vmatprep.subr.mxu0 0.0
  %169 = vmatpush1.msra.mxu0 0.0
  %170 = vmatprep.subr.mxu0 0.0
  %171 = vmatpush1.msra.mxu0 0.0
  %172 = vmatprep.subr.mxu0 0.0
  %173 = vmatpush1.msra.mxu0 0.0
  %174 = vmatprep.subr.mxu0 0.0
  %175 = vmatpush1.msra.mxu0 0.0
  %176 = vmatprep.subr.mxu0 0.0
  %177 = vmatpush1.msra.mxu0 0.0
  %178 = vmatprep.subr.mxu0 0.0
  %179 = vmatpush1.msra.mxu0 0.0
  %180 = vmatprep.subr.mxu0 0.0
  %181 = vmatpush1.msra.mxu0 %v146
  %182 = vmatprep.subr.mxu0 0.0
  %183 = vmatpush1.msra.mxu0 %v145
  %184 = vmatprep.subr.mxu0 0.0
  %185 = vmatpush1.msra.mxu0 %v144
  %186 = vmatprep.subr.mxu0 0.0
  %187 = vmatpush1.msra.mxu0 %v143
  %188 = vmatprep.subr.mxu0 0.0
  %189 = vmatpush2.msra.mxu0 0.0
  %190 = vmatprep.subr.mxu0 0.0
  %191 = vmatpush2.msra.mxu0 0.0
  %192 = vmatprep.subr.mxu0 0.0
  %193 = vmatpush2.msra.mxu0 0.0
  %194 = vmatprep.subr.mxu0 0.0
  %195 = vmatpush2.msra.mxu0 0.0
  %196 = vmatprep.subr.mxu0 0.0
  %197 = vmatpush2.msra.mxu0 0.0
  %198 = vmatprep.subr.mxu0 0.0
  %199 = vmatpush2.msra.mxu0 0.0
  %200 = vmatprep.subr.mxu0 0.0
  %201 = vmatpush2.msra.mxu0 0.0
  %202 = vmatprep.subr.mxu0 0.0
  %203 = vmatpush2.msra.mxu0 0.0
  %204 = vmatprep.subr.mxu0 0.0
  %205 = vmatpush2.msra.mxu0 0.0
  %206 = vmatprep.subr.mxu0 0.0
  %207 = vmatpush2.msra.mxu0 0.0
  %208 = vmatprep.subr.mxu0 0.0
  %209 = vmatpush2.msra.mxu0 0.0
  %210 = vmatprep.subr.mxu0 0.0
  %211 = vmatpush2.msra.mxu0 0.0
  %212 = vmatprep.subr.mxu0 0.0
  %213 = vmatpush2.msra.mxu0 0.0
  %214 = vmatprep.subr.mxu0 0.0
  %215 = vmatpush2.msra.mxu0 0.0
  %216 = vmatprep.subr.mxu0 0.0
  %217 = vmatpush2.msra.mxu0 0.0
  %218 = vmatprep.subr.mxu0 0.0
  %219 = vmatpush2.msra.mxu0 0.0
  %220 = vmatprep.mubr.f32.mxu0 0.0
  %221 = vmatmul.mubr.f32.gmra.mxu0 %v151
  %v222 = vpop.f32.mrf.mxu0
  %v223 = vadd.f32 0.0, %v222
  %v224 = vpop.f32.mrf.mxu0
  %225 = vmatprep.mubr.f32.mxu0 0.0
  %226 = vmatmul.mubr.f32.gmra.mxu0 %v154
  %v227 = vpop.f32.mrf.mxu0
  %v228 = vadd.f32 0.0, %v227
  %v229 = vpop.f32.mrf.mxu0
  %230 = vdwg.mxu0
  %231 = vst [vmem:[#allocation2] sm:$0xff] 0.0
  %232 = vst [vmem:[#allocation2 + $0x8] sm:$0xff] 0.0
  %233 = vst [vmem:[#allocation2 + $0x10] sm:$0xff] 0.0
  %234 = vst [vmem:[#allocation2 + $0x18] sm:$0xff] 0.0
  %235 = vst [vmem:[#allocation2 + $0x20] sm:$0xff] 0.0
  %vm236 = vcmask 781312
  %237 = vst.msk [vmem:[#allocation2] sm:$0xf] %vm236, %v223
  %v239 = vrot.slane %v223, 1
  %241 = vst.msk [vmem:[#allocation2 + $0x8] sm:$0xf] %vm236, %v239
  %v242 = vrot.slane %v223, 2
  %244 = vst.msk [vmem:[#allocation2 + $0x10] sm:$0xf] %vm236, %v242
  %v245 = vrot.slane %v223, 3
  %247 = vst.msk [vmem:[#allocation2 + $0x18] sm:$0xf] %vm236, %v245
  %v248 = vrot.slane %v223, 4
  %250 = vst.msk [vmem:[#allocation2 + $0x20] sm:$0xf] %vm236, %v248
  %v252 = vrot.slane %v228, 4
  %vm254 = vcmask 785412
  %255 = vst.msk [vmem:[#allocation2] sm:$0xf0] %vm254, %v252
  %v256 = vrot.slane %v228, 5
  %258 = vst.msk [vmem:[#allocation2 + $0x8] sm:$0xf0] %vm254, %v256
  %v259 = vrot.slane %v228, 6
  %261 = vst.msk [vmem:[#allocation2 + $0x10] sm:$0xf0] %vm254, %v259
  %v262 = vrot.slane %v228, 7
  %264 = vst.msk [vmem:[#allocation2 + $0x18] sm:$0xf0] %vm254, %v262
  %265 = vst.msk [vmem:[#allocation2 + $0x20] sm:$0xf0] %vm254, %v228
  %v266 = vld [vmem:[#allocation2] sm:$0xff]
  %v267 = vld [vmem:[#allocation2 + $0x8] sm:$0xff]
  %v268 = vld [vmem:[#allocation2 + $0x10] sm:$0xff]
  %v269 = vld [vmem:[#allocation2 + $0x18] sm:$0xff]
  %v270 = vld [vmem:[#allocation2 + $0x20] sm:$0xff]
  %v271 = vld [vmem:[%s2] sm:$0xff]
  %v272 = vld [vmem:[%s2 + $0x8] sm:$0xff]
  %v273 = vld [vmem:[%s2 + $0x10] sm:$0xff]
  %v274 = vld [vmem:[%s2 + $0x18] sm:$0xff]
  %v275 = vld [vmem:[%s2 + $0x20] sm:$0xff]
  %v276 = vld [vmem:[%s2 + $0x28] sm:$0xff]
  %v277 = vld [vmem:[%s2 + $0x30] sm:$0xff]
  %v278 = vld [vmem:[%s2 + $0x38] sm:$0xff]
  %v279 = vld [vmem:[%s2 + $0x40] sm:$0xff]
  %v280 = vld [vmem:[%s2 + $0x48] sm:$0xff]
  %v281 = vld [vmem:[%s2 + $0x50] sm:$0xff]
  %v282 = vld [vmem:[%s2 + $0x58] sm:$0xff]
  %v283 = vld [vmem:[%s2 + $0x60] sm:$0xff]
  %v284 = vld [vmem:[%s2 + $0x68] sm:$0xff]
  %v285 = vld [vmem:[%s2 + $0x70] sm:$0xff]
  %v286 = vld [vmem:[%s2 + $0x78] sm:$0xff]
  %v287 = vld [vmem:[%s2 + $0x80] sm:$0xff]
  %v288 = vld [vmem:[%s2 + $0x88] sm:$0xff]
  %v289 = vld [vmem:[%s2 + $0x90] sm:$0xff]
  %v290 = vld [vmem:[%s2 + $0x98] sm:$0xff]
  %v291 = vld [vmem:[%s2 + $0xa0] sm:$0xff]
  %v292 = vld [vmem:[%s2 + $0xa8] sm:$0xff]
  %v293 = vld [vmem:[%s2 + $0xb0] sm:$0xff]
  %v294 = vld [vmem:[%s2 + $0xb8] sm:$0xff]
  %v295 = vld [vmem:[%s2 + $0xc0] sm:$0xff]
  %v296 = vld [vmem:[%s2 + $0xc8] sm:$0xff]
  %v297 = vld [vmem:[%s2 + $0xd0] sm:$0xff]
  %v298 = vld [vmem:[%s2 + $0xd8] sm:$0xff]
  %v299 = vld [vmem:[%s2 + $0xe0] sm:$0xff]
  %v300 = vld [vmem:[%s2 + $0xe8] sm:$0xff]
  %v301 = vld [vmem:[%s2 + $0xf0] sm:$0xff]
  %v302 = vld [vmem:[%s2 + $0xf8] sm:$0xff]
  %v303 = vld [vmem:[%s2 + $0x100] sm:$0xff]
  %v304 = vld [vmem:[%s2 + $0x108] sm:$0xff]
  %v305 = vld [vmem:[%s2 + $0x110] sm:$0xff]
  %v306 = vld [vmem:[%s2 + $0x118] sm:$0xff]
  %v307 = vld [vmem:[%s2 + $0x120] sm:$0xff]
  %v308 = vld [vmem:[%s2 + $0x128] sm:$0xff]
  %v309 = vld [vmem:[%s2 + $0x130] sm:$0xff]
  %v310 = vld [vmem:[%s2 + $0x138] sm:$0xff]
  %v311 = vld [vmem:[%s2 + $0x140] sm:$0xff]
  %v312 = vld [vmem:[%s2 + $0x148] sm:$0xff]
  %v313 = vld [vmem:[%s2 + $0x150] sm:$0xff]
  %v314 = vld [vmem:[%s2 + $0x158] sm:$0xff]
  %v315 = vld [vmem:[%s2 + $0x160] sm:$0xff]
  %v316 = vld [vmem:[%s2 + $0x168] sm:$0xff]
  %v317 = vld [vmem:[%s2 + $0x170] sm:$0xff]
  %v318 = vld [vmem:[%s2 + $0x178] sm:$0xff]
  %v319 = vld [vmem:[%s2 + $0x180] sm:$0xff]
  %v320 = vld [vmem:[%s2 + $0x188] sm:$0xff]
  %v321 = vld [vmem:[%s2 + $0x190] sm:$0xff]
  %v322 = vld [vmem:[%s2 + $0x198] sm:$0xff]
  %v323 = vld [vmem:[%s2 + $0x1a0] sm:$0xff]
  %v324 = vld [vmem:[%s2 + $0x1a8] sm:$0xff]
  %v325 = vld [vmem:[%s2 + $0x1b0] sm:$0xff]
  %v326 = vld [vmem:[%s2 + $0x1b8] sm:$0xff]
  %v327 = vld [vmem:[%s2 + $0x1c0] sm:$0xff]
  %v328 = vld [vmem:[%s2 + $0x1c8] sm:$0xff]
  %v329 = vld [vmem:[%s2 + $0x1d0] sm:$0xff]
  %v330 = vld [vmem:[%s2 + $0x1d8] sm:$0xff]
  %v331 = vld [vmem:[%s2 + $0x1e0] sm:$0xff]
  %v332 = vld [vmem:[%s2 + $0x1e8] sm:$0xff]
  %v333 = vld [vmem:[%s2 + $0x1f0] sm:$0xff]
  %v334 = vld [vmem:[%s2 + $0x1f8] sm:$0xff]
  %v335 = vld [vmem:[%s2 + $0x200] sm:$0xff]
  %v336 = vld [vmem:[%s2 + $0x208] sm:$0xff]
  %v337 = vld [vmem:[%s2 + $0x210] sm:$0xff]
  %v338 = vld [vmem:[%s2 + $0x218] sm:$0xff]
  %v339 = vld [vmem:[%s2 + $0x220] sm:$0xff]
  %v340 = vld [vmem:[%s2 + $0x228] sm:$0xff]
  %v341 = vld [vmem:[%s2 + $0x230] sm:$0xff]
  %v342 = vld [vmem:[%s2 + $0x238] sm:$0xff]
  %v343 = vld [vmem:[%s2 + $0x240] sm:$0xff]
  %v344 = vld [vmem:[%s2 + $0x248] sm:$0xff]
  %v345 = vld [vmem:[%s2 + $0x250] sm:$0xff]
  %v346 = vld [vmem:[%s2 + $0x258] sm:$0xff]
  %v347 = vld [vmem:[%s2 + $0x260] sm:$0xff]
  %v348 = vld [vmem:[%s2 + $0x268] sm:$0xff]
  %v349 = vld [vmem:[%s2 + $0x270] sm:$0xff]
  %v350 = vld [vmem:[%s2 + $0x278] sm:$0xff]
  %v351 = vld [vmem:[%s1 + $0x338] sm:$0x1]
  %v352 = vlaneseq
  %v353 = vshrl.u32 %v352, 7
  %v354 = vsub.s32 0, %v353
  %v355 = vrot.slane %v351, %v354
  %356 = vmatprep.subr.mxu0 0.0
  %357 = vmatpush1.msra.mxu0 %v286
  %358 = vmatprep.subr.mxu0 0.0
  %359 = vmatpush1.msra.mxu0 %v285
  %360 = vmatprep.subr.mxu0 0.0
  %361 = vmatpush1.msra.mxu0 %v284
  %362 = vmatprep.subr.mxu0 0.0
  %363 = vmatpush1.msra.mxu0 %v283
  %364 = vmatprep.subr.mxu0 0.0
  %365 = vmatpush1.msra.mxu0 %v282
  %366 = vmatprep.subr.mxu0 0.0
  %367 = vmatpush1.msra.mxu0 %v281
  %368 = vmatprep.subr.mxu0 0.0
  %369 = vmatpush1.msra.mxu0 %v280
  %370 = vmatprep.subr.mxu0 0.0
  %371 = vmatpush1.msra.mxu0 %v279
  %372 = vmatprep.subr.mxu0 0.0
  %373 = vmatpush1.msra.mxu0 %v278
  %374 = vmatprep.subr.mxu0 0.0
  %375 = vmatpush1.msra.mxu0 %v277
  %376 = vmatprep.subr.mxu0 0.0
  %377 = vmatpush1.msra.mxu0 %v276
  %378 = vmatprep.subr.mxu0 0.0
  %379 = vmatpush1.msra.mxu0 %v275
  %380 = vmatprep.subr.mxu0 0.0
  %381 = vmatpush1.msra.mxu0 %v274
  %382 = vmatprep.subr.mxu0 0.0
  %383 = vmatpush1.msra.mxu0 %v273
  %384 = vmatprep.subr.mxu0 0.0
  %385 = vmatpush1.msra.mxu0 %v272
  %386 = vmatprep.subr.mxu0 0.0
  %387 = vmatpush1.msra.mxu0 %v271
  %388 = vmatprep.subr.mxu0 0.0
  %389 = vmatpush2.msra.mxu0 %v302
  %390 = vmatprep.subr.mxu0 0.0
  %391 = vmatpush2.msra.mxu0 %v301
  %392 = vmatprep.subr.mxu0 0.0
  %393 = vmatpush2.msra.mxu0 %v300
  %394 = vmatprep.subr.mxu0 0.0
  %395 = vmatpush2.msra.mxu0 %v299
  %396 = vmatprep.subr.mxu0 0.0
  %397 = vmatpush2.msra.mxu0 %v298
  %398 = vmatprep.subr.mxu0 0.0
  %399 = vmatpush2.msra.mxu0 %v297
  %400 = vmatprep.subr.mxu0 0.0
  %401 = vmatpush2.msra.mxu0 %v296
  %402 = vmatprep.subr.mxu0 0.0
  %403 = vmatpush2.msra.mxu0 %v295
  %404 = vmatprep.subr.mxu0 0.0
  %405 = vmatpush2.msra.mxu0 %v294
  %406 = vmatprep.subr.mxu0 0.0
  %407 = vmatpush2.msra.mxu0 %v293
  %408 = vmatprep.subr.mxu0 0.0
  %409 = vmatpush2.msra.mxu0 %v292
  %410 = vmatprep.subr.mxu0 0.0
  %411 = vmatpush2.msra.mxu0 %v291
  %412 = vmatprep.subr.mxu0 0.0
  %413 = vmatpush2.msra.mxu0 %v290
  %414 = vmatprep.subr.mxu0 0.0
  %415 = vmatpush2.msra.mxu0 %v289
  %416 = vmatprep.subr.mxu0 0.0
  %417 = vmatpush2.msra.mxu0 %v288
  %418 = vmatprep.subr.mxu0 0.0
  %419 = vmatpush2.msra.mxu0 %v287
  %420 = vmatprep.mubr.f32.mxu0 %v267
  %421 = vmatmul.mubr.f32.gmra.mxu0 %v266
  %v422 = vpop.f32.mrf.mxu0
  %v423 = vadd.f32 %v355, %v422
  %v424 = vpop.f32.mrf.mxu0
  %425 = vdwg.mxu0
  %426 = vmatprep.subr.mxu0 0.0
  %427 = vmatpush1.msra.mxu0 %v318
  %428 = vmatprep.subr.mxu0 0.0
  %429 = vmatpush1.msra.mxu0 %v317
  %430 = vmatprep.subr.mxu0 0.0
  %431 = vmatpush1.msra.mxu0 %v316
  %432 = vmatprep.subr.mxu0 0.0
  %433 = vmatpush1.msra.mxu0 %v315
  %434 = vmatprep.subr.mxu0 0.0
  %435 = vmatpush1.msra.mxu0 %v314
  %436 = vmatprep.subr.mxu0 0.0
  %437 = vmatpush1.msra.mxu0 %v313
  %438 = vmatprep.subr.mxu0 0.0
  %439 = vmatpush1.msra.mxu0 %v312
  %440 = vmatprep.subr.mxu0 0.0
  %441 = vmatpush1.msra.mxu0 %v311
  %442 = vmatprep.subr.mxu0 0.0
  %443 = vmatpush1.msra.mxu0 %v310
  %444 = vmatprep.subr.mxu0 0.0
  %445 = vmatpush1.msra.mxu0 %v309
  %446 = vmatprep.subr.mxu0 0.0
  %447 = vmatpush1.msra.mxu0 %v308
  %448 = vmatprep.subr.mxu0 0.0
  %449 = vmatpush1.msra.mxu0 %v307
  %450 = vmatprep.subr.mxu0 0.0
  %451 = vmatpush1.msra.mxu0 %v306
  %452 = vmatprep.subr.mxu0 0.0
  %453 = vmatpush1.msra.mxu0 %v305
  %454 = vmatprep.subr.mxu0 0.0
  %455 = vmatpush1.msra.mxu0 %v304
  %456 = vmatprep.subr.mxu0 0.0
  %457 = vmatpush1.msra.mxu0 %v303
  %458 = vmatprep.subr.mxu0 0.0
  %459 = vmatpush2.msra.mxu0 %v334
  %460 = vmatprep.subr.mxu0 0.0
  %461 = vmatpush2.msra.mxu0 %v333
  %462 = vmatprep.subr.mxu0 0.0
  %463 = vmatpush2.msra.mxu0 %v332
  %464 = vmatprep.subr.mxu0 0.0
  %465 = vmatpush2.msra.mxu0 %v331
  %466 = vmatprep.subr.mxu0 0.0
  %467 = vmatpush2.msra.mxu0 %v330
  %468 = vmatprep.subr.mxu0 0.0
  %469 = vmatpush2.msra.mxu0 %v329
  %470 = vmatprep.subr.mxu0 0.0
  %471 = vmatpush2.msra.mxu0 %v328
  %472 = vmatprep.subr.mxu0 0.0
  %473 = vmatpush2.msra.mxu0 %v327
  %474 = vmatprep.subr.mxu0 0.0
  %475 = vmatpush2.msra.mxu0 %v326
  %476 = vmatprep.subr.mxu0 0.0
  %477 = vmatpush2.msra.mxu0 %v325
  %478 = vmatprep.subr.mxu0 0.0
  %479 = vmatpush2.msra.mxu0 %v324
  %480 = vmatprep.subr.mxu0 0.0
  %481 = vmatpush2.msra.mxu0 %v323
  %482 = vmatprep.subr.mxu0 0.0
  %483 = vmatpush2.msra.mxu0 %v322
  %484 = vmatprep.subr.mxu0 0.0
  %485 = vmatpush2.msra.mxu0 %v321
  %486 = vmatprep.subr.mxu0 0.0
  %487 = vmatpush2.msra.mxu0 %v320
  %488 = vmatprep.subr.mxu0 0.0
  %489 = vmatpush2.msra.mxu0 %v319
  %490 = vmatprep.mubr.f32.mxu0 %v269
  %491 = vmatmul.mubr.f32.gmra.mxu0 %v268
  %v492 = vpop.f32.mrf.mxu0
  %v493 = vadd.f32 %v423, %v492
  %v494 = vpop.f32.mrf.mxu0
  %495 = vdwg.mxu0
  %496 = vmatprep.subr.mxu0 0.0
  %497 = vmatpush1.msra.mxu0 %v350
  %498 = vmatprep.subr.mxu0 0.0
  %499 = vmatpush1.msra.mxu0 %v349
  %500 = vmatprep.subr.mxu0 0.0
  %501 = vmatpush1.msra.mxu0 %v348
  %502 = vmatprep.subr.mxu0 0.0
  %503 = vmatpush1.msra.mxu0 %v347
  %504 = vmatprep.subr.mxu0 0.0
  %505 = vmatpush1.msra.mxu0 %v346
  %506 = vmatprep.subr.mxu0 0.0
  %507 = vmatpush1.msra.mxu0 %v345
  %508 = vmatprep.subr.mxu0 0.0
  %509 = vmatpush1.msra.mxu0 %v344
  %510 = vmatprep.subr.mxu0 0.0
  %511 = vmatpush1.msra.mxu0 %v343
  %512 = vmatprep.subr.mxu0 0.0
  %513 = vmatpush1.msra.mxu0 %v342
  %514 = vmatprep.subr.mxu0 0.0
  %515 = vmatpush1.msra.mxu0 %v341
  %516 = vmatprep.subr.mxu0 0.0
  %517 = vmatpush1.msra.mxu0 %v340
  %518 = vmatprep.subr.mxu0 0.0
  %519 = vmatpush1.msra.mxu0 %v339
  %520 = vmatprep.subr.mxu0 0.0
  %521 = vmatpush1.msra.mxu0 %v338
  %522 = vmatprep.subr.mxu0 0.0
  %523 = vmatpush1.msra.mxu0 %v337
  %524 = vmatprep.subr.mxu0 0.0
  %525 = vmatpush1.msra.mxu0 %v336
  %526 = vmatprep.subr.mxu0 0.0
  %527 = vmatpush1.msra.mxu0 %v335
  %528 = vmatprep.subr.mxu0 0.0
  %529 = vmatpush2.msra.mxu0 0.0
  %530 = vmatprep.subr.mxu0 0.0
  %531 = vmatpush2.msra.mxu0 0.0
  %532 = vmatprep.subr.mxu0 0.0
  %533 = vmatpush2.msra.mxu0 0.0
  %534 = vmatprep.subr.mxu0 0.0
  %535 = vmatpush2.msra.mxu0 0.0
  %536 = vmatprep.subr.mxu0 0.0
  %537 = vmatpush2.msra.mxu0 0.0
  %538 = vmatprep.subr.mxu0 0.0
  %539 = vmatpush2.msra.mxu0 0.0
  %540 = vmatprep.subr.mxu0 0.0
  %541 = vmatpush2.msra.mxu0 0.0
  %542 = vmatprep.subr.mxu0 0.0
  %543 = vmatpush2.msra.mxu0 0.0
  %544 = vmatprep.subr.mxu0 0.0
  %545 = vmatpush2.msra.mxu0 0.0
  %546 = vmatprep.subr.mxu0 0.0
  %547 = vmatpush2.msra.mxu0 0.0
  %548 = vmatprep.subr.mxu0 0.0
  %549 = vmatpush2.msra.mxu0 0.0
  %550 = vmatprep.subr.mxu0 0.0
  %551 = vmatpush2.msra.mxu0 0.0
  %552 = vmatprep.subr.mxu0 0.0
  %553 = vmatpush2.msra.mxu0 0.0
  %554 = vmatprep.subr.mxu0 0.0
  %555 = vmatpush2.msra.mxu0 0.0
  %556 = vmatprep.subr.mxu0 0.0
  %557 = vmatpush2.msra.mxu0 0.0
  %558 = vmatprep.subr.mxu0 0.0
  %559 = vmatpush2.msra.mxu0 0.0
  %560 = vmatprep.mubr.f32.mxu0 0.0
  %561 = vmatmul.mubr.f32.gmra.mxu0 %v270
  %v562 = vpop.f32.mrf.mxu0
  %v563 = vadd.f32 %v493, %v562
  %v564 = vpop.f32.mrf.mxu0
  %565 = vdwg.mxu0
  %v566 = vmul.f32 %v563, 0.5
  %v567 = vtanh.pop %v566
  %v568 = vadd.f32 %v567, 1.0
  %v569 = vmul.f32 %v568, 0.5
  %570 = vst [vmem:[#allocation3] sm:$0xff] 0.0
  %vm571 = vcmask 516096
  %572 = vst.msk [vmem:[#allocation3] sm:$0x1] %vm571, %v569
  %v575 = vunpack.c.l.s4 1983009808
  %v576 = vunpack.c.0.s8 %v575
  %v577 = vlaneseq
  %v578 = vshrl.u32 %v577, 7
  %v579 = vsub.s32 %v576, %v578
  %v580 = vrot.slane %v569, %v579
  %v581 = vrot.slane %v580, 7
  %v582 = vrot.slane %v581, 2
  %584 = vst.msk [vmem:[#allocation3 + $0x2] sm:$0x1] %vm571, %v582
  %v585 = vcombine.high %v580, %v580
  %587 = vst.msk [vmem:[#allocation3 + $0x4] sm:$0x1] %vm571, %v585
  %v588 = vrot.slane %v585, 7
  %v589 = vrot.slane %v588, 2
  %591 = vst.msk [vmem:[#allocation3 + $0x6] sm:$0x1] %vm571, %v589
  %v592 = vcombine.high %v569, %v569
  %v594 = vunpack.c.l.s4 1983009808
  %v595 = vunpack.c.0.s8 %v594
  %v596 = vlaneseq
  %v597 = vshrl.u32 %v596, 7
  %v598 = vsub.s32 %v595, %v597
  %v599 = vrot.slane %v592, %v598
  %601 = vst.msk [vmem:[#allocation3 + $0x1] sm:$0x1] %vm571, %v599
  %v602 = vrot.slane %v599, 7
  %v603 = vrot.slane %v602, 2
  %605 = vst.msk [vmem:[#allocation3 + $0x3] sm:$0x1] %vm571, %v603
  %v606 = vcombine.high %v599, %v599
  %608 = vst.msk [vmem:[#allocation3 + $0x5] sm:$0x1] %vm571, %v606
  %v609 = vrot.slane %v606, 7
  %v610 = vrot.slane %v609, 2
  %612 = vst.msk [vmem:[#allocation3 + $0x7] sm:$0x1] %vm571, %v610
  %v613 = vld [vmem:[#allocation3] sm:$0xff]
  %v614 = vld [vmem:[%s1 + $0x60] sm:$0xff]
  %v615 = vld [vmem:[%s1 + $0x68] sm:$0xff]
  %v616 = vld [vmem:[%s1 + $0x70] sm:$0xff]
  %v617 = vld [vmem:[%s1 + $0x78] sm:$0xff]
  %v618 = vld [vmem:[%s1 + $0x80] sm:$0xff]
  %v619 = vld [vmem:[%s1 + $0x88] sm:$0xff]
  %v620 = vld [vmem:[%s1 + $0x90] sm:$0xff]
  %v621 = vld [vmem:[%s1 + $0x98] sm:$0xff]
  %v622 = vld [vmem:[%s1 + $0xa0] sm:$0xff]
  %v623 = vld [vmem:[%s1 + $0xa8] sm:$0xff]
  %v624 = vld [vmem:[%s1 + $0xb0] sm:$0xff]
  %v625 = vld [vmem:[%s1 + $0xb8] sm:$0xff]
  %v626 = vld [vmem:[%s1 + $0xc0] sm:$0xff]
  %v627 = vld [vmem:[%s1 + $0xc8] sm:$0xff]
  %v628 = vld [vmem:[%s1 + $0xd0] sm:$0xff]
  %v629 = vld [vmem:[%s1 + $0xd8] sm:$0xff]
  %v630 = vld [vmem:[%s1 + $0xe0] sm:$0xff]
  %v631 = vld [vmem:[%s1 + $0xe8] sm:$0xff]
  %v632 = vld [vmem:[%s1 + $0xf0] sm:$0xff]
  %v633 = vld [vmem:[%s1 + $0xf8] sm:$0xff]
  %v634 = vld [vmem:[%s1 + $0x100] sm:$0xff]
  %v635 = vld [vmem:[%s1 + $0x108] sm:$0xff]
  %v636 = vld [vmem:[%s1 + $0x110] sm:$0xff]
  %v637 = vld [vmem:[%s1 + $0x118] sm:$0xff]
  %v638 = vld [vmem:[%s1 + $0x120] sm:$0xff]
  %v639 = vld [vmem:[%s1 + $0x128] sm:$0xff]
  %v640 = vld [vmem:[%s1 + $0x130] sm:$0xff]
  %v641 = vld [vmem:[%s1 + $0x138] sm:$0xff]
  %v642 = vld [vmem:[%s1 + $0x140] sm:$0xff]
  %v643 = vld [vmem:[%s1 + $0x148] sm:$0xff]
  %v644 = vld [vmem:[%s1 + $0x150] sm:$0xff]
  %v645 = vld [vmem:[%s1 + $0x158] sm:$0xff]
  %v646 = vld [vmem:[%s1 + $0x160] sm:$0xff]
  %v647 = vld [vmem:[%s1 + $0x168] sm:$0xff]
  %v648 = vld [vmem:[%s1 + $0x170] sm:$0xff]
  %v649 = vld [vmem:[%s1 + $0x178] sm:$0xff]
  %v650 = vld [vmem:[%s1 + $0x180] sm:$0xff]
  %v651 = vld [vmem:[%s1 + $0x188] sm:$0xff]
  %v652 = vld [vmem:[%s1 + $0x190] sm:$0xff]
  %v653 = vld [vmem:[%s1 + $0x198] sm:$0xff]
  %v654 = vld [vmem:[%s1 + $0x1a0] sm:$0xff]
  %v655 = vld [vmem:[%s1 + $0x1a8] sm:$0xff]
  %v656 = vld [vmem:[%s1 + $0x1b0] sm:$0xff]
  %v657 = vld [vmem:[%s1 + $0x1b8] sm:$0xff]
  %v658 = vld [vmem:[%s1 + $0x1c0] sm:$0xff]
  %v659 = vld [vmem:[%s1 + $0x1c8] sm:$0xff]
  %v660 = vld [vmem:[%s1 + $0x1d0] sm:$0xff]
  %v661 = vld [vmem:[%s1 + $0x1d8] sm:$0xff]
  %v662 = vld [vmem:[%s1 + $0x1e0] sm:$0xff]
  %v663 = vld [vmem:[%s1 + $0x1e8] sm:$0xff]
  %v664 = vld [vmem:[%s1 + $0x1f0] sm:$0xff]
  %v665 = vld [vmem:[%s1 + $0x1f8] sm:$0xff]
  %v666 = vld [vmem:[%s1 + $0x200] sm:$0xff]
  %v667 = vld [vmem:[%s1 + $0x208] sm:$0xff]
  %v668 = vld [vmem:[%s1 + $0x210] sm:$0xff]
  %v669 = vld [vmem:[%s1 + $0x218] sm:$0xff]
  %v670 = vld [vmem:[%s1 + $0x220] sm:$0xff]
  %v671 = vld [vmem:[%s1 + $0x228] sm:$0xff]
  %v672 = vld [vmem:[%s1 + $0x230] sm:$0xff]
  %v673 = vld [vmem:[%s1 + $0x238] sm:$0xff]
  %v674 = vld [vmem:[%s1 + $0x240] sm:$0xff]
  %v675 = vld [vmem:[%s1 + $0x248] sm:$0xff]
  %v676 = vld [vmem:[%s1 + $0x250] sm:$0xff]
  %v677 = vld [vmem:[%s1 + $0x258] sm:$0xff]
  %v678 = vld [vmem:[%s1 + $0x340] sm:$0x1]
  %v679 = vlaneseq
  %v680 = vshrl.u32 %v679, 7
  %v681 = vsub.s32 0, %v680
  %v682 = vrot.slane %v678, %v681
  %v684 = vcombine.high %v613, %v613
  %v686 = vunpack.c.l.s4 1983009808
  %v687 = vunpack.c.0.s8 %v686
  %v688 = vlaneseq
  %v689 = vshrl.u32 %v688, 7
  %v690 = vsub.s32 %v687, %v689
  %v691 = vrot.slane %v613, %v690
  %v693 = vunpack.c.l.s4 1983009808
  %v694 = vunpack.c.0.s8 %v693
  %v695 = vlaneseq
  %v696 = vshrl.u32 %v695, 7
  %v697 = vsub.s32 %v694, %v696
  %v698 = vrot.slane %v684, %v697
  %v699 = vcombine.high %v691, %v691
  %v700 = vcombine.high %v698, %v698
  %705 = vmatprep.subr.mxu0 0.0
  %706 = vmatpush1.msra.mxu0 %v629
  %707 = vmatprep.subr.mxu0 0.0
  %708 = vmatpush1.msra.mxu0 %v628
  %709 = vmatprep.subr.mxu0 0.0
  %710 = vmatpush1.msra.mxu0 %v627
  %711 = vmatprep.subr.mxu0 0.0
  %712 = vmatpush1.msra.mxu0 %v626
  %713 = vmatprep.subr.mxu0 0.0
  %714 = vmatpush1.msra.mxu0 %v625
  %715 = vmatprep.subr.mxu0 0.0
  %716 = vmatpush1.msra.mxu0 %v624
  %717 = vmatprep.subr.mxu0 0.0
  %718 = vmatpush1.msra.mxu0 %v623
  %719 = vmatprep.subr.mxu0 0.0
  %720 = vmatpush1.msra.mxu0 %v622
  %721 = vmatprep.subr.mxu0 0.0
  %722 = vmatpush1.msra.mxu0 %v621
  %723 = vmatprep.subr.mxu0 0.0
  %724 = vmatpush1.msra.mxu0 %v620
  %725 = vmatprep.subr.mxu0 0.0
  %726 = vmatpush1.msra.mxu0 %v619
  %727 = vmatprep.subr.mxu0 0.0
  %728 = vmatpush1.msra.mxu0 %v618
  %729 = vmatprep.subr.mxu0 0.0
  %730 = vmatpush1.msra.mxu0 %v617
  %731 = vmatprep.subr.mxu0 0.0
  %732 = vmatpush1.msra.mxu0 %v616
  %733 = vmatprep.subr.mxu0 0.0
  %734 = vmatpush1.msra.mxu0 %v615
  %735 = vmatprep.subr.mxu0 0.0
  %736 = vmatpush1.msra.mxu0 %v614
  %737 = vmatprep.subr.mxu0 0.0
  %738 = vmatpush2.msra.mxu0 %v645
  %739 = vmatprep.subr.mxu0 0.0
  %740 = vmatpush2.msra.mxu0 %v644
  %741 = vmatprep.subr.mxu0 0.0
  %742 = vmatpush2.msra.mxu0 %v643
  %743 = vmatprep.subr.mxu0 0.0
  %744 = vmatpush2.msra.mxu0 %v642
  %745 = vmatprep.subr.mxu0 0.0
  %746 = vmatpush2.msra.mxu0 %v641
  %747 = vmatprep.subr.mxu0 0.0
  %748 = vmatpush2.msra.mxu0 %v640
  %749 = vmatprep.subr.mxu0 0.0
  %750 = vmatpush2.msra.mxu0 %v639
  %751 = vmatprep.subr.mxu0 0.0
  %752 = vmatpush2.msra.mxu0 %v638
  %753 = vmatprep.subr.mxu0 0.0
  %754 = vmatpush2.msra.mxu0 %v637
  %755 = vmatprep.subr.mxu0 0.0
  %756 = vmatpush2.msra.mxu0 %v636
  %757 = vmatprep.subr.mxu0 0.0
  %758 = vmatpush2.msra.mxu0 %v635
  %759 = vmatprep.subr.mxu0 0.0
  %760 = vmatpush2.msra.mxu0 %v634
  %761 = vmatprep.subr.mxu0 0.0
  %762 = vmatpush2.msra.mxu0 %v633
  %763 = vmatprep.subr.mxu0 0.0
  %764 = vmatpush2.msra.mxu0 %v632
  %765 = vmatprep.subr.mxu0 0.0
  %766 = vmatpush2.msra.mxu0 %v631
  %767 = vmatprep.subr.mxu0 0.0
  %768 = vmatpush2.msra.mxu0 %v630
  %769 = vmatprep.mubr.f32.mxu0 %v699
  %770 = vmatmul.mubr.f32.gmra.mxu0 %v691
  %v771 = vpop.f32.mrf.mxu0
  %v772 = vadd.f32 %v682, %v771
  %v773 = vpop.f32.mrf.mxu0
  %774 = vdwg.mxu0
  %775 = vmatprep.subr.mxu0 0.0
  %776 = vmatpush1.msra.mxu0 %v661
  %777 = vmatprep.subr.mxu0 0.0
  %778 = vmatpush1.msra.mxu0 %v660
  %779 = vmatprep.subr.mxu0 0.0
  %780 = vmatpush1.msra.mxu0 %v659
  %781 = vmatprep.subr.mxu0 0.0
  %782 = vmatpush1.msra.mxu0 %v658
  %783 = vmatprep.subr.mxu0 0.0
  %784 = vmatpush1.msra.mxu0 %v657
  %785 = vmatprep.subr.mxu0 0.0
  %786 = vmatpush1.msra.mxu0 %v656
  %787 = vmatprep.subr.mxu0 0.0
  %788 = vmatpush1.msra.mxu0 %v655
  %789 = vmatprep.subr.mxu0 0.0
  %790 = vmatpush1.msra.mxu0 %v654
  %791 = vmatprep.subr.mxu0 0.0
  %792 = vmatpush1.msra.mxu0 %v653
  %793 = vmatprep.subr.mxu0 0.0
  %794 = vmatpush1.msra.mxu0 %v652
  %795 = vmatprep.subr.mxu0 0.0
  %796 = vmatpush1.msra.mxu0 %v651
  %797 = vmatprep.subr.mxu0 0.0
  %798 = vmatpush1.msra.mxu0 %v650
  %799 = vmatprep.subr.mxu0 0.0
  %800 = vmatpush1.msra.mxu0 %v649
  %801 = vmatprep.subr.mxu0 0.0
  %802 = vmatpush1.msra.mxu0 %v648
  %803 = vmatprep.subr.mxu0 0.0
  %804 = vmatpush1.msra.mxu0 %v647
  %805 = vmatprep.subr.mxu0 0.0
  %806 = vmatpush1.msra.mxu0 %v646
  %807 = vmatprep.subr.mxu0 0.0
  %808 = vmatpush2.msra.mxu0 %v677
  %809 = vmatprep.subr.mxu0 0.0
  %810 = vmatpush2.msra.mxu0 %v676
  %811 = vmatprep.subr.mxu0 0.0
  %812 = vmatpush2.msra.mxu0 %v675
  %813 = vmatprep.subr.mxu0 0.0
  %814 = vmatpush2.msra.mxu0 %v674
  %815 = vmatprep.subr.mxu0 0.0
  %816 = vmatpush2.msra.mxu0 %v673
  %817 = vmatprep.subr.mxu0 0.0
  %818 = vmatpush2.msra.mxu0 %v672
  %819 = vmatprep.subr.mxu0 0.0
  %820 = vmatpush2.msra.mxu0 %v671
  %821 = vmatprep.subr.mxu0 0.0
  %822 = vmatpush2.msra.mxu0 %v670
  %823 = vmatprep.subr.mxu0 0.0
  %824 = vmatpush2.msra.mxu0 %v669
  %825 = vmatprep.subr.mxu0 0.0
  %826 = vmatpush2.msra.mxu0 %v668
  %827 = vmatprep.subr.mxu0 0.0
  %828 = vmatpush2.msra.mxu0 %v667
  %829 = vmatprep.subr.mxu0 0.0
  %830 = vmatpush2.msra.mxu0 %v666
  %831 = vmatprep.subr.mxu0 0.0
  %832 = vmatpush2.msra.mxu0 %v665
  %833 = vmatprep.subr.mxu0 0.0
  %834 = vmatpush2.msra.mxu0 %v664
  %835 = vmatprep.subr.mxu0 0.0
  %836 = vmatpush2.msra.mxu0 %v663
  %837 = vmatprep.subr.mxu0 0.0
  %838 = vmatpush2.msra.mxu0 %v662
  %839 = vmatprep.mubr.f32.mxu0 %v700
  %840 = vmatmul.mubr.f32.gmra.mxu0 %v698
  %v841 = vpop.f32.mrf.mxu0
  %v842 = vadd.f32 %v772, %v841
  %v843 = vpop.f32.mrf.mxu0
  %844 = vdwg.mxu0
  %v845 = vmul.f32 %v842, 0.5
  %v846 = vtanh.pop %v845
  %v847 = vadd.f32 %v846, 1.0
  %v848 = vmul.f32 %v847, 0.5
  %v849 = vld [vmem:[%s1 + $0x260] sm:$0xff]
  %v850 = vld [vmem:[%s1 + $0x268] sm:$0xff]
  %v851 = vld [vmem:[%s1 + $0x270] sm:$0xff]
  %v852 = vld [vmem:[%s1 + $0x278] sm:$0xff]
  %v853 = vld [vmem:[%s1 + $0x280] sm:$0xff]
  %v854 = vld [vmem:[%s1 + $0x288] sm:$0xff]
  %v855 = vld [vmem:[%s1 + $0x290] sm:$0xff]
  %v856 = vld [vmem:[%s1 + $0x298] sm:$0xff]
  %v857 = vld [vmem:[%s1 + $0x2a0] sm:$0xff]
  %v858 = vld [vmem:[%s1 + $0x2a8] sm:$0xff]
  %v859 = vld [vmem:[%s1 + $0x2b0] sm:$0xff]
  %v860 = vld [vmem:[%s1 + $0x2b8] sm:$0xff]
  %v861 = vld [vmem:[%s1 + $0x2c0] sm:$0xff]
  %v862 = vld [vmem:[%s1 + $0x2c8] sm:$0xff]
  %v863 = vld [vmem:[%s1 + $0x2d0] sm:$0xff]
  %v864 = vld [vmem:[%s1 + $0x348] sm:$0x1]
  %v865 = vlaneseq
  %v866 = vshrl.u32 %v865, 7
  %v867 = vsub.s32 0, %v866
  %v868 = vrot.slane %v864, %v867
  %vm869 = vcmask 982016
  %v871 = vsel %vm869, %v848, 0
  %873 = vmatprep.subr.mxu0 0.0
  %874 = vmatpush1.msra.mxu0 0.0
  %875 = vmatprep.subr.mxu0 0.0
  %876 = vmatpush1.msra.mxu0 %v863
  %877 = vmatprep.subr.mxu0 0.0
  %878 = vmatpush1.msra.mxu0 %v862
  %879 = vmatprep.subr.mxu0 0.0
  %880 = vmatpush1.msra.mxu0 %v861
  %881 = vmatprep.subr.mxu0 0.0
  %882 = vmatpush1.msra.mxu0 %v860
  %883 = vmatprep.subr.mxu0 0.0
  %884 = vmatpush1.msra.mxu0 %v859
  %885 = vmatprep.subr.mxu0 0.0
  %886 = vmatpush1.msra.mxu0 %v858
  %887 = vmatprep.subr.mxu0 0.0
  %888 = vmatpush1.msra.mxu0 %v857
  %889 = vmatprep.subr.mxu0 0.0
  %890 = vmatpush1.msra.mxu0 %v856
  %891 = vmatprep.subr.mxu0 0.0
  %892 = vmatpush1.msra.mxu0 %v855
  %893 = vmatprep.subr.mxu0 0.0
  %894 = vmatpush1.msra.mxu0 %v854
  %895 = vmatprep.subr.mxu0 0.0
  %896 = vmatpush1.msra.mxu0 %v853
  %897 = vmatprep.subr.mxu0 0.0
  %898 = vmatpush1.msra.mxu0 %v852
  %899 = vmatprep.subr.mxu0 0.0
  %900 = vmatpush1.msra.mxu0 %v851
  %901 = vmatprep.subr.mxu0 0.0
  %902 = vmatpush1.msra.mxu0 %v850
  %903 = vmatprep.subr.mxu0 0.0
  %904 = vmatpush1.msra.mxu0 %v849
  %905 = vmatprep.subr.mxu0 0.0
  %906 = vmatpush2.msra.mxu0 0.0
  %907 = vmatprep.subr.mxu0 0.0
  %908 = vmatpush2.msra.mxu0 0.0
  %909 = vmatprep.subr.mxu0 0.0
  %910 = vmatpush2.msra.mxu0 0.0
  %911 = vmatprep.subr.mxu0 0.0
  %912 = vmatpush2.msra.mxu0 0.0
  %913 = vmatprep.subr.mxu0 0.0
  %914 = vmatpush2.msra.mxu0 0.0
  %915 = vmatprep.subr.mxu0 0.0
  %916 = vmatpush2.msra.mxu0 0.0
  %917 = vmatprep.subr.mxu0 0.0
  %918 = vmatpush2.msra.mxu0 0.0
  %919 = vmatprep.subr.mxu0 0.0
  %920 = vmatpush2.msra.mxu0 0.0
  %921 = vmatprep.subr.mxu0 0.0
  %922 = vmatpush2.msra.mxu0 0.0
  %923 = vmatprep.subr.mxu0 0.0
  %924 = vmatpush2.msra.mxu0 0.0
  %925 = vmatprep.subr.mxu0 0.0
  %926 = vmatpush2.msra.mxu0 0.0
  %927 = vmatprep.subr.mxu0 0.0
  %928 = vmatpush2.msra.mxu0 0.0
  %929 = vmatprep.subr.mxu0 0.0
  %930 = vmatpush2.msra.mxu0 0.0
  %931 = vmatprep.subr.mxu0 0.0
  %932 = vmatpush2.msra.mxu0 0.0
  %933 = vmatprep.subr.mxu0 0.0
  %934 = vmatpush2.msra.mxu0 0.0
  %935 = vmatprep.subr.mxu0 0.0
  %936 = vmatpush2.msra.mxu0 0.0
  %937 = vmatprep.mubr.f32.mxu0 0.0
  %938 = vmatmul.mubr.f32.gmra.mxu0 %v871
  %v939 = vpop.f32.mrf.mxu0
  %v940 = vadd.f32 %v868, %v939
  %v941 = vpop.f32.mrf.mxu0
  %942 = vdwg.mxu0
  %v943 = vmul.f32 %v940, 0.5
  %v944 = vtanh.pop %v943
  %v945 = vadd.f32 %v944, 1.0
  %v946 = vmul.f32 %v945, 0.5
  %v947 = vld [vmem:[%s1 + $0x2d8] sm:$0xff]
  %v948 = vld [vmem:[%s1 + $0x2e0] sm:$0xff]
  %v949 = vld [vmem:[%s1 + $0x2e8] sm:$0xff]
  %v950 = vld [vmem:[%s1 + $0x2f0] sm:$0xff]
  %v951 = vld [vmem:[%s1 + $0x2f8] sm:$0xff]
  %v952 = vld [vmem:[%s1 + $0x300] sm:$0xff]
  %v953 = vld [vmem:[%s1 + $0x308] sm:$0xff]
  %v954 = vld [vmem:[%s1 + $0x310] sm:$0xff]
  %v955 = vld [vmem:[%s1 + $0x318] sm:$0xff]
  %v956 = vld [vmem:[%s1 + $0x320] sm:$0xff]
  %v957 = vld [vmem:[%s1 + $0x328] sm:$0xf]
  %v958 = vld [vmem:[%s1 + $0x350] sm:$0x1]
  %v959 = vlaneseq
  %v960 = vshrl.u32 %v959, 7
  %v961 = vsub.s32 0, %v960
  %v962 = vrot.slane %v958, %v961
  %vm963 = vcmask 687104
  %v965 = vsel %vm963, %v946, 0
  %vm967 = vcmask 1043456
  %v969 = vsel %vm967, %v957, 0
  %971 = vmatprep.subr.mxu0 0.0
  %972 = vmatpush1.msra.mxu0 0.0
  %973 = vmatprep.subr.mxu0 0.0
  %974 = vmatpush1.msra.mxu0 0.0
  %975 = vmatprep.subr.mxu0 0.0
  %976 = vmatpush1.msra.mxu0 0.0
  %977 = vmatprep.subr.mxu0 0.0
  %978 = vmatpush1.msra.mxu0 0.0
  %979 = vmatprep.subr.mxu0 0.0
  %980 = vmatpush1.msra.mxu0 0.0
  %981 = vmatprep.subr.mxu0 0.0
  %982 = vmatpush1.msra.mxu0 %v969
  %983 = vmatprep.subr.mxu0 0.0
  %984 = vmatpush1.msra.mxu0 %v956
  %985 = vmatprep.subr.mxu0 0.0
  %986 = vmatpush1.msra.mxu0 %v955
  %987 = vmatprep.subr.mxu0 0.0
  %988 = vmatpush1.msra.mxu0 %v954
  %989 = vmatprep.subr.mxu0 0.0
  %990 = vmatpush1.msra.mxu0 %v953
  %991 = vmatprep.subr.mxu0 0.0
  %992 = vmatpush1.msra.mxu0 %v952
  %993 = vmatprep.subr.mxu0 0.0
  %994 = vmatpush1.msra.mxu0 %v951
  %995 = vmatprep.subr.mxu0 0.0
  %996 = vmatpush1.msra.mxu0 %v950
  %997 = vmatprep.subr.mxu0 0.0
  %998 = vmatpush1.msra.mxu0 %v949
  %999 = vmatprep.subr.mxu0 0.0
  %1000 = vmatpush1.msra.mxu0 %v948
  %1001 = vmatprep.subr.mxu0 0.0
  %1002 = vmatpush1.msra.mxu0 %v947
  %1003 = vmatprep.subr.mxu0 0.0
  %1004 = vmatpush2.msra.mxu0 0.0
  %1005 = vmatprep.subr.mxu0 0.0
  %1006 = vmatpush2.msra.mxu0 0.0
  %1007 = vmatprep.subr.mxu0 0.0
  %1008 = vmatpush2.msra.mxu0 0.0
  %1009 = vmatprep.subr.mxu0 0.0
  %1010 = vmatpush2.msra.mxu0 0.0
  %1011 = vmatprep.subr.mxu0 0.0
  %1012 = vmatpush2.msra.mxu0 0.0
  %1013 = vmatprep.subr.mxu0 0.0
  %1014 = vmatpush2.msra.mxu0 0.0
  %1015 = vmatprep.subr.mxu0 0.0
  %1016 = vmatpush2.msra.mxu0 0.0
  %1017 = vmatprep.subr.mxu0 0.0
  %1018 = vmatpush2.msra.mxu0 0.0
  %1019 = vmatprep.subr.mxu0 0.0
  %1020 = vmatpush2.msra.mxu0 0.0
  %1021 = vmatprep.subr.mxu0 0.0
  %1022 = vmatpush2.msra.mxu0 0.0
  %1023 = vmatprep.subr.mxu0 0.0
  %1024 = vmatpush2.msra.mxu0 0.0
  %1025 = vmatprep.subr.mxu0 0.0
  %1026 = vmatpush2.msra.mxu0 0.0
  %1027 = vmatprep.subr.mxu0 0.0
  %1028 = vmatpush2.msra.mxu0 0.0
  %1029 = vmatprep.subr.mxu0 0.0
  %1030 = vmatpush2.msra.mxu0 0.0
  %1031 = vmatprep.subr.mxu0 0.0
  %1032 = vmatpush2.msra.mxu0 0.0
  %1033 = vmatprep.subr.mxu0 0.0
  %1034 = vmatpush2.msra.mxu0 0.0
  %1035 = vmatprep.mubr.f32.mxu0 0.0
  %1036 = vmatmul.mubr.f32.gmra.mxu0 %v965
  %v1037 = vpop.f32.mrf.mxu0
  %v1038 = vadd.f32 %v962, %v1037
  %v1039 = vpop.f32.mrf.mxu0
  %1040 = vdwg.mxu0
  %1041 = vst [vmem:[%s3] sm:$0x3] %v1038
  // Predicated region
  $region14: #{lenet_forward.1} parent=0 // pred_check
    _
  $region15: #{lenet_forward.1} parent=0 // pred_check_branch
    %1043 = sbr.rel (0) target = $region17
  $region16: #{lenet_forward.1} parent=0 // pred_region
    _
  $region17: #{lenet_forward.1} parent=0 // pred_fallthru
    _
  // Predicated region
  $region18: #{lenet_forward.1} parent=0 // pred_check
    _
  $region19: #{lenet_forward.1} parent=0 // pred_check_branch
    %1045 = sbr.rel (0) target = $region21
  $region20: #{lenet_forward.1} parent=0 // pred_region
    _
  $region21: #{lenet_forward.1} parent=0 // pred_fallthru
    _

</llo_original>
